<compile_context>
chip_gen: v7x
topology: tpu7x:2x2x1
jax: 0.10.0
libtpu: 0.0.40
codegen_flags: <defaults>
</compile_context>

<pallas_src>
import jax
import jax.numpy as jnp
from jax.experimental import pallas as pl
from jax.experimental.pallas import tpu as pltpu


def _out_transition_kernel(w_ref, b_ref, x_ref, o_ref):
    # w_ref: (L, C) f32 in SMEM     b_ref: (L,) f32 in SMEM
    # x_ref: (C, TS, 128) in VMEM   o_ref: (L, TS, 128) in VMEM
    L, C = w_ref.shape
    for l in range(L):                                # tiny static unroll
        acc = x_ref[0].astype(jnp.float32) * w_ref[l, 0]
        for c in range(1, C):
            acc = acc + x_ref[c].astype(jnp.float32) * w_ref[l, c]
        acc = acc + b_ref[l]
        # sigmoid(x) = 0.5 * tanh(0.5 * x) + 0.5  (exact; tanh -> EUP slot)
        o_ref[l] = (0.5 * jnp.tanh(0.5 * acc) + 0.5).astype(o_ref.dtype)


def output_transition(x_ncdhw, weight, bias, *, tile_rows=1024,
                      out_dtype=jnp.float32):
    """x_ncdhw: (N, C, D, H, W); weight: (L, C) (PyTorch Conv3d weight
    (L, C, 1, 1, 1) squeezed); bias: (L,). Returns (N, L, D, H, W)."""
    N, C, D, H, W = x_ncdhw.shape
    L = weight.shape[0]
    S = D * H * W

    # Free view to (N, C, S); pad S to a lane multiple only if ragged.
    x_flat = x_ncdhw.reshape(N, C, S)
    S_pad = ((S + 127) // 128) * 128
    if S_pad != S:
        # TODO(synk): ragged spatial size takes one extra HBM copy for padding.
        x_flat = jnp.pad(x_flat, ((0, 0), (0, 0), (0, S_pad - S)))
    R = S_pad // 128
    x_r = x_flat.reshape(N, C, R, 128)   # spatial packed into (sublane, lane)

    # Spatial tile: TS sublane rows x 128 lanes per step.
    assert tile_rows % 8 == 0
    TS = min(tile_rows, R)               # TS == R (full dim) or multiple of 8
    if N == 1 and TS == R and R >= 16:
        # Split the spatial axis so both v7x TensorCores get balanced work.
        TS = ((-(-R // 2) + 7) // 8) * 8
    grid = (N, pl.cdiv(R, TS))

    w_sm = weight.astype(jnp.float32)    # (L, C) scalars -> SMEM
    b_sm = bias.astype(jnp.float32)      # (L,)   scalars -> SMEM

    out = pl.pallas_call(
        _out_transition_kernel,
        out_shape=jax.ShapeDtypeStruct((N, L, R, 128), out_dtype),
        grid=grid,
        in_specs=[
            pl.BlockSpec(memory_space=pltpu.MemorySpace.SMEM),            # weight
            pl.BlockSpec(memory_space=pltpu.MemorySpace.SMEM),            # bias
            pl.BlockSpec((None, C, TS, 128), lambda n, s: (n, 0, s, 0)),  # x
        ],
        out_specs=pl.BlockSpec((None, L, TS, 128), lambda n, s: (n, 0, s, 0)),
        compiler_params=pltpu.CompilerParams(
            dimension_semantics=("parallel", "parallel")),
    )(w_sm, b_sm, x_r)

    out = out.reshape(N, L, S_pad)
    if S_pad != S:
        out = out[:, :, :S]
    return out.reshape(N, L, D, H, W)


def reference(x_ncdhw, weight, bias):
    # pure-JAX reference of Conv3d(kernel_size=1) + sigmoid
    y = jnp.einsum("ncdhw,lc->nldhw", x_ncdhw, weight) \
        + bias[None, :, None, None, None]
    return jax.nn.sigmoid(y)


if __name__ == "__main__":
    key = jax.random.PRNGKey(0)
    k_x, k_w, k_b = jax.random.split(key, 3)

    # small shapes consistent with the module: inChans=4, n_labels=2
    N, C, D, H, W = 2, 4, 8, 8, 8
    L = 2

    x = jax.random.normal(k_x, (N, C, D, H, W), dtype=jnp.float32)
    # Conv3d weight (L, C, 1, 1, 1) squeezed to (L, C); PyTorch-style init bounds
    bound = 1.0 / (C ** 0.5)
    weight = jax.random.uniform(k_w, (L, C), minval=-bound, maxval=bound,
                                dtype=jnp.float32)
    bias = jax.random.uniform(k_b, (L,), minval=-bound, maxval=bound,
                              dtype=jnp.float32)

    out = output_transition(x, weight, bias)
    jax.block_until_ready(out)

    ref = reference(x, weight, bias)
    assert out.shape == (N, L, D, H, W)
    assert jnp.allclose(out, ref, atol=2e-5, rtol=1e-5)

    print("KERNEL_OK")
</pallas_src>

<mosaic_0001>
module attributes {stable_mosaic.version = 11 : i64} {
  func.func @_out_transition_kernel(%arg0: i32, %arg1: i32, %arg2: memref<2x4xf32, #tpu.memory_space<smem>>, %arg3: memref<2xf32, #tpu.memory_space<smem>>, %arg4: memref<1x4x4x128xf32, #tpu.memory_space<vmem>>, %arg5: memref<1x2x4x128xf32, #tpu.memory_space<vmem>>) attributes {dimension_semantics = [#tpu.dimension_semantics<parallel>, #tpu.dimension_semantics<parallel>], iteration_bounds = array<i64: 2, 1>, scalar_prefetch = 0 : i64, scratch_operands = 0 : i64, tpu.core_type = #tpu.core_type<tc>, window_params = [{transform_indices = @transform_0, window_bounds = array<i64: 2, 4>}, {transform_indices = @transform_1, window_bounds = array<i64: 2>}, {transform_indices = @transform_2, window_bounds = array<i64: 1, 4, 4, 128>}, {transform_indices = @transform_3, window_bounds = array<i64: 1, 2, 4, 128>}]} {
    %c0 = arith.constant 0 : index
    %c0_0 = arith.constant 0 : index
    %c0_1 = arith.constant 0 : index
    %c0_2 = arith.constant 0 : index
    %0 = vector.load %arg4[%c0, %c0_0, %c0_1, %c0_2] : memref<1x4x4x128xf32, #tpu.memory_space<vmem>>, vector<1x1x4x128xf32>
    %1 = vector.shape_cast %0 : vector<1x1x4x128xf32> to vector<4x128xf32>
    %c0_3 = arith.constant 0 : index
    %c0_4 = arith.constant 0 : index
    %2 = memref.load %arg2[%c0_3, %c0_4] : memref<2x4xf32, #tpu.memory_space<smem>>
    %3 = vector.broadcast %2 : f32 to vector<4x128xf32>
    %4 = arith.mulf %1, %3 : vector<4x128xf32>
    %c0_5 = arith.constant 0 : index
    %c1 = arith.constant 1 : index
    %c0_6 = arith.constant 0 : index
    %c0_7 = arith.constant 0 : index
    %5 = vector.load %arg4[%c0_5, %c1, %c0_6, %c0_7] : memref<1x4x4x128xf32, #tpu.memory_space<vmem>>, vector<1x1x4x128xf32>
    %6 = vector.shape_cast %5 : vector<1x1x4x128xf32> to vector<4x128xf32>
    %c0_8 = arith.constant 0 : index
    %c1_9 = arith.constant 1 : index
    %7 = memref.load %arg2[%c0_8, %c1_9] : memref<2x4xf32, #tpu.memory_space<smem>>
    %8 = vector.broadcast %7 : f32 to vector<4x128xf32>
    %9 = arith.mulf %6, %8 : vector<4x128xf32>
    %10 = arith.addf %4, %9 : vector<4x128xf32>
    %c0_10 = arith.constant 0 : index
    %c2 = arith.constant 2 : index
    %c0_11 = arith.constant 0 : index
    %c0_12 = arith.constant 0 : index
    %11 = vector.load %arg4[%c0_10, %c2, %c0_11, %c0_12] : memref<1x4x4x128xf32, #tpu.memory_space<vmem>>, vector<1x1x4x128xf32>
    %12 = vector.shape_cast %11 : vector<1x1x4x128xf32> to vector<4x128xf32>
    %c0_13 = arith.constant 0 : index
    %c2_14 = arith.constant 2 : index
    %13 = memref.load %arg2[%c0_13, %c2_14] : memref<2x4xf32, #tpu.memory_space<smem>>
    %14 = vector.broadcast %13 : f32 to vector<4x128xf32>
    %15 = arith.mulf %12, %14 : vector<4x128xf32>
    %16 = arith.addf %10, %15 : vector<4x128xf32>
    %c0_15 = arith.constant 0 : index
    %c3 = arith.constant 3 : index
    %c0_16 = arith.constant 0 : index
    %c0_17 = arith.constant 0 : index
    %17 = vector.load %arg4[%c0_15, %c3, %c0_16, %c0_17] : memref<1x4x4x128xf32, #tpu.memory_space<vmem>>, vector<1x1x4x128xf32>
    %18 = vector.shape_cast %17 : vector<1x1x4x128xf32> to vector<4x128xf32>
    %c0_18 = arith.constant 0 : index
    %c3_19 = arith.constant 3 : index
    %19 = memref.load %arg2[%c0_18, %c3_19] : memref<2x4xf32, #tpu.memory_space<smem>>
    %20 = vector.broadcast %19 : f32 to vector<4x128xf32>
    %21 = arith.mulf %18, %20 : vector<4x128xf32>
    %22 = arith.addf %16, %21 : vector<4x128xf32>
    %c0_20 = arith.constant 0 : index
    %23 = memref.load %arg3[%c0_20] : memref<2xf32, #tpu.memory_space<smem>>
    %24 = vector.broadcast %23 : f32 to vector<4x128xf32>
    %25 = arith.addf %22, %24 : vector<4x128xf32>
    %cst = arith.constant 5.000000e-01 : f32
    %26 = vector.broadcast %cst : f32 to vector<4x128xf32>
    %27 = arith.mulf %26, %25 : vector<4x128xf32>
    %28 = math.tanh %27 : vector<4x128xf32>
    %cst_21 = arith.constant 5.000000e-01 : f32
    %29 = vector.broadcast %cst_21 : f32 to vector<4x128xf32>
    %30 = arith.mulf %29, %28 : vector<4x128xf32>
    %cst_22 = arith.constant 5.000000e-01 : f32
    %31 = vector.broadcast %cst_22 : f32 to vector<4x128xf32>
    %32 = arith.addf %30, %31 : vector<4x128xf32>
    %c0_23 = arith.constant 0 : index
    %c0_24 = arith.constant 0 : index
    %c0_25 = arith.constant 0 : index
    %c0_26 = arith.constant 0 : index
    %33 = vector.load %arg5[%c0_23, %c0_24, %c0_25, %c0_26] : memref<1x2x4x128xf32, #tpu.memory_space<vmem>>, vector<1x1x4x128xf32>
    %34 = vector.shape_cast %33 : vector<1x1x4x128xf32> to vector<4x128xf32>
    %35 = vector.shape_cast %32 : vector<4x128xf32> to vector<1x1x4x128xf32>
    tpu.vector_store %arg5[%c0_23, %c0_24, %c0_25, %c0_26], %35 {strides = array<i32>} : memref<1x2x4x128xf32, #tpu.memory_space<vmem>>, vector<1x1x4x128xf32>,
    %c0_27 = arith.constant 0 : index
    %c0_28 = arith.constant 0 : index
    %c0_29 = arith.constant 0 : index
    %c0_30 = arith.constant 0 : index
    %36 = vector.load %arg4[%c0_27, %c0_28, %c0_29, %c0_30] : memref<1x4x4x128xf32, #tpu.memory_space<vmem>>, vector<1x1x4x128xf32>
    %37 = vector.shape_cast %36 : vector<1x1x4x128xf32> to vector<4x128xf32>
    %c1_31 = arith.constant 1 : index
    %c0_32 = arith.constant 0 : index
    %38 = memref.load %arg2[%c1_31, %c0_32] : memref<2x4xf32, #tpu.memory_space<smem>>
    %39 = vector.broadcast %38 : f32 to vector<4x128xf32>
    %40 = arith.mulf %37, %39 : vector<4x128xf32>
    %c0_33 = arith.constant 0 : index
    %c1_34 = arith.constant 1 : index
    %c0_35 = arith.constant 0 : index
    %c0_36 = arith.constant 0 : index
    %41 = vector.load %arg4[%c0_33, %c1_34, %c0_35, %c0_36] : memref<1x4x4x128xf32, #tpu.memory_space<vmem>>, vector<1x1x4x128xf32>
    %42 = vector.shape_cast %41 : vector<1x1x4x128xf32> to vector<4x128xf32>
    %c1_37 = arith.constant 1 : index
    %c1_38 = arith.constant 1 : index
    %43 = memref.load %arg2[%c1_37, %c1_38] : memref<2x4xf32, #tpu.memory_space<smem>>
    %44 = vector.broadcast %43 : f32 to vector<4x128xf32>
    %45 = arith.mulf %42, %44 : vector<4x128xf32>
    %46 = arith.addf %40, %45 : vector<4x128xf32>
    %c0_39 = arith.constant 0 : index
    %c2_40 = arith.constant 2 : index
    %c0_41 = arith.constant 0 : index
    %c0_42 = arith.constant 0 : index
    %47 = vector.load %arg4[%c0_39, %c2_40, %c0_41, %c0_42] : memref<1x4x4x128xf32, #tpu.memory_space<vmem>>, vector<1x1x4x128xf32>
    %48 = vector.shape_cast %47 : vector<1x1x4x128xf32> to vector<4x128xf32>
    %c1_43 = arith.constant 1 : index
    %c2_44 = arith.constant 2 : index
    %49 = memref.load %arg2[%c1_43, %c2_44] : memref<2x4xf32, #tpu.memory_space<smem>>
    %50 = vector.broadcast %49 : f32 to vector<4x128xf32>
    %51 = arith.mulf %48, %50 : vector<4x128xf32>
    %52 = arith.addf %46, %51 : vector<4x128xf32>
    %c0_45 = arith.constant 0 : index
    %c3_46 = arith.constant 3 : index
    %c0_47 = arith.constant 0 : index
    %c0_48 = arith.constant 0 : index
    %53 = vector.load %arg4[%c0_45, %c3_46, %c0_47, %c0_48] : memref<1x4x4x128xf32, #tpu.memory_space<vmem>>, vector<1x1x4x128xf32>
    %54 = vector.shape_cast %53 : vector<1x1x4x128xf32> to vector<4x128xf32>
    %c1_49 = arith.constant 1 : index
    %c3_50 = arith.constant 3 : index
    %55 = memref.load %arg2[%c1_49, %c3_50] : memref<2x4xf32, #tpu.memory_space<smem>>
    %56 = vector.broadcast %55 : f32 to vector<4x128xf32>
    %57 = arith.mulf %54, %56 : vector<4x128xf32>
    %58 = arith.addf %52, %57 : vector<4x128xf32>
    %c1_51 = arith.constant 1 : index
    %59 = memref.load %arg3[%c1_51] : memref<2xf32, #tpu.memory_space<smem>>
    %60 = vector.broadcast %59 : f32 to vector<4x128xf32>
    %61 = arith.addf %58, %60 : vector<4x128xf32>
    %cst_52 = arith.constant 5.000000e-01 : f32
    %62 = vector.broadcast %cst_52 : f32 to vector<4x128xf32>
    %63 = arith.mulf %62, %61 : vector<4x128xf32>
    %64 = math.tanh %63 : vector<4x128xf32>
    %cst_53 = arith.constant 5.000000e-01 : f32
    %65 = vector.broadcast %cst_53 : f32 to vector<4x128xf32>
    %66 = arith.mulf %65, %64 : vector<4x128xf32>
    %cst_54 = arith.constant 5.000000e-01 : f32
    %67 = vector.broadcast %cst_54 : f32 to vector<4x128xf32>
    %68 = arith.addf %66, %67 : vector<4x128xf32>
    %c0_55 = arith.constant 0 : index
    %c1_56 = arith.constant 1 : index
    %c0_57 = arith.constant 0 : index
    %c0_58 = arith.constant 0 : index
    %69 = vector.load %arg5[%c0_55, %c1_56, %c0_57, %c0_58] : memref<1x2x4x128xf32, #tpu.memory_space<vmem>>, vector<1x1x4x128xf32>
    %70 = vector.shape_cast %69 : vector<1x1x4x128xf32> to vector<4x128xf32>
    %71 = vector.shape_cast %68 : vector<4x128xf32> to vector<1x1x4x128xf32>
    tpu.vector_store %arg5[%c0_55, %c1_56, %c0_57, %c0_58], %71 {strides = array<i32>} : memref<1x2x4x128xf32, #tpu.memory_space<vmem>>, vector<1x1x4x128xf32>,
    return
  }
  func.func @transform_0(%arg0: i32, %arg1: i32) -> (i32, i32) {
    %c0_i32 = arith.constant 0 : i32
    %c0_i32_0 = arith.constant 0 : i32
    %c0_i32_1 = arith.constant 0 : i32
    return %c0_i32, %c0_i32_0 : i32, i32
  }
  func.func @transform_1(%arg0: i32, %arg1: i32) -> i32 {
    %c0_i32 = arith.constant 0 : i32
    %c0_i32_0 = arith.constant 0 : i32
    return %c0_i32 : i32
  }
  func.func @transform_2(%arg0: i32, %arg1: i32) -> (i32, i32, i32, i32) {
    %c0_i32 = arith.constant 0 : i32
    %c0_i32_0 = arith.constant 0 : i32
    %c0_i32_1 = arith.constant 0 : i32
    return %arg0, %c0_i32, %arg1, %c0_i32_0 : i32, i32, i32, i32
  }
  func.func @transform_3(%arg0: i32, %arg1: i32) -> (i32, i32, i32, i32) {
    %c0_i32 = arith.constant 0 : i32
    %c0_i32_0 = arith.constant 0 : i32
    %c0_i32_1 = arith.constant 0 : i32
    return %arg0, %c0_i32, %arg1, %c0_i32_0 : i32, i32, i32, i32
  }
}

</mosaic_0001>

<llo_original>
// kernel: tpu_custom_call.1
$region0: #{tpu_custom_call.1}
  #allocation0 [shape = 'u32[]', space=smem, size = 0x4, offset = 0x4, fixed_abs, tag = 'smem constant byte address 0x4 - core index']
  #allocation1 [shape = 'u32[144,128]{1,0:T(1,128)}', space=vmem, size = 0x12000, scoped, tag = 'internal scratch']
  %s0 = inlined_call_operand.hbm [shape: f32[2,4], index: 0, kind: input, shape index: {}]
  %s1 = inlined_call_operand.vmem [shape: f32[2], index: 1, kind: input, shape index: {}]
  %s2 = inlined_call_operand.hbm [shape: f32[2,4,4,128], index: 2, kind: input, shape index: {}]
  %s3 = inlined_call_operand.hbm [shape: f32[2,2,4,128], index: 3, kind: output, shape index: {}]
  %s4 = sld [smem:[#allocation0]]
  $region57: #{tpu_custom_call.1} parent=0
    _
  %s6 = ssub.s32 1, %s4
  %s7 = scalar_select 0, %s6, %s4
  $region1: #{tpu_custom_call.1} parent=0
    #allocation2 [shape = 'u8[1024]{0}', space=smem, size = 0x400, scoped, tag = 'input window, operand 0, single buffered']
    #allocation3 [shape = 's32[2]{0}', space=sflag, size = 0x8, scoped, tag = 'scoped memory for tpu_custom_call.1']
    #allocation4 [shape = 's32[2]{0}', space=sflag, size = 0x8, scoped, tag = 'scoped memory for tpu_custom_call.1']
    #allocation5 [shape = 's32[2]{0}', space=sflag, size = 0x8, scoped, tag = 'scoped memory for tpu_custom_call.1']
    #allocation6 [shape = 's32[2]{0}', space=sflag, size = 0x8, scoped, tag = 'scoped memory for tpu_custom_call.1']
    #allocation7 [shape = 'u8[512]{0}', space=smem, size = 0x200, scoped, tag = 'input window, operand 1, single buffered']
    #allocation8 [shape = 'u8[16384]{0}', space=vmem, size = 0x4000, scoped, tag = 'input window, operand 2']
    #allocation9 [shape = 'u8[8192]{0}', space=vmem, size = 0x2000, scoped, tag = 'output window, operand 0']
    %8 = vsyncpa [#allocation5], 0
    %9 = vsyncpa [#allocation6], 0
    %10 = vsyncpa [#allocation3], 0
    %s11 = scalar_lea.sflag [#allocation3], 1
    %12 = vsyncpa %s11, 0
    %13 = vsyncpa [#allocation4], 0
    %s14 = scalar_lea.sflag [#allocation4], 1
    %15 = vsyncpa %s14, 0
    loop: start=0, step=1, limit=4
    $region2: #{tpu_custom_call.1} parent=1 // loop_pre_header
      _
    $region3: #{tpu_custom_call.1} parent=1 // loop_header
      %s17 = sphi 0, %s21
      %p18 = scmp.ge.s32.totalorder %s17, 4
      %s24 = sphi 0, %s36
      %s25 = sphi 0, %s32
      %s26 = sphi 0, %s24
      %s27 = sphi 0, %s25
      %s28 = sphi 0, %s26
      %s29 = sphi 0, %s27
      %s37 = sphi 0, %s37
      %s39 = sphi 0, %s37
      %s40 = sphi 0, %s39
      %s54 = sphi 0, %s40
      %s58 = sphi 0, %s58
      %s60 = sphi 0, %s58
      %s61 = sphi 0, %s60
      %s75 = sphi 0, %s61
      %s83 = sphi 0, %s85
      %s86 = sphi 0, %s83
      %s87 = sphi 0, %s86
      %s103 = sphi 0, %s87
      %s111 = sphi 0, %s113
      %s114 = sphi 0, %s111
      %s115 = sphi 0, %s114
      %s131 = sphi 0, %s115
    $region4: #{tpu_custom_call.1} parent=1 // loop_header_branch
      %20 = sbr.rel (%p18) target = $region8
    $region5: #{tpu_custom_call.1} parent=1 // loop_body
      %s22 = ssub.s32 %s17, 1
      %s23 = ssub.s32 %s17, 2
      %s30 = sadd.s32 1, %s25
      %p31 = scmp.ge.s32.totalorder %s30, 1
      %s32 = scalar_select %p31, 0, %s30
      %s33 = sadd.s32 1, %s24
      %s34 = scalar_select %p31, %s33, %s24
      %p35 = scmp.ge.s32.totalorder %s34, 2
      %s36 = scalar_select %p35, 0, %s34
      %s38 = sadd.s32 %s37, 1
      %p41 = scmp.eq.s32.totalorder %s17, 1
      %p42 = scmp.ne.s32.totalorder %s37, %s39
      %p43 = scmp.eq.s32.totalorder %s17, 0
      %p44 = por %p42, %p43
      %p45 = scmp.ne.s32.totalorder %s37, %s39
      %p46 = scmp.eq.s32.totalorder %s22, 1
      %p47 = por %p45, %p46
      %p48 = scmp.ne.s32.totalorder %s39, %s40
      %p49 = scmp.eq.s32.totalorder %s22, 0
      %p50 = por %p48, %p49
      %p51 = scmp.ne.s32.totalorder %s39, %s40
      %p52 = scmp.eq.s32.totalorder %s23, 1
      %p53 = por %p51, %p52
      %p55 = scmp.ne.s32.totalorder %s40, %s54
      %p56 = scmp.eq.s32.totalorder %s23, 0
      %p57 = por %p55, %p56
      %s59 = sadd.s32 %s58, 1
      %p62 = scmp.eq.s32.totalorder %s17, 1
      %p63 = scmp.ne.s32.totalorder %s58, %s60
      %p64 = scmp.eq.s32.totalorder %s17, 0
      %p65 = por %p63, %p64
      %p66 = scmp.ne.s32.totalorder %s58, %s60
      %p67 = scmp.eq.s32.totalorder %s22, 1
      %p68 = por %p66, %p67
      %p69 = scmp.ne.s32.totalorder %s60, %s61
      %p70 = scmp.eq.s32.totalorder %s22, 0
      %p71 = por %p69, %p70
      %p72 = scmp.ne.s32.totalorder %s60, %s61
      %p73 = scmp.eq.s32.totalorder %s23, 1
      %p74 = por %p72, %p73
      %p76 = scmp.ne.s32.totalorder %s61, %s75
      %p77 = scmp.eq.s32.totalorder %s23, 0
      %p78 = por %p76, %p77
      %s79 = ssub.s32 %s24, %s36
      %s80 = ssub.s32 %s25, %s32
      %s81 = sor.u32 %s79, %s80
      %p82 = scmp.eq.s32.totalorder %s81, 0
      %s84 = sadd.s32 %s83, 1
      %s85 = scalar_select %p82, %s83, %s84
      %p88 = pneg %p82
      %p89 = scmp.eq.s32.totalorder %s17, 1
      %p90 = por %p88, %p89
      %p91 = scmp.ne.s32.totalorder %s83, %s86
      %p92 = scmp.eq.s32.totalorder %s17, 0
      %p93 = por %p91, %p92
      %p94 = scmp.ne.s32.totalorder %s83, %s86
      %p95 = scmp.eq.s32.totalorder %s22, 1
      %p96 = por %p94, %p95
      %p97 = scmp.ne.s32.totalorder %s86, %s87
      %p98 = scmp.eq.s32.totalorder %s22, 0
      %p99 = por %p97, %p98
      %p100 = scmp.ne.s32.totalorder %s86, %s87
      %p101 = scmp.eq.s32.totalorder %s23, 1
      %p102 = por %p100, %p101
      %p104 = scmp.ne.s32.totalorder %s87, %s103
      %p105 = scmp.eq.s32.totalorder %s23, 0
      %p106 = por %p104, %p105
      %s107 = ssub.s32 %s24, %s36
      %s108 = ssub.s32 %s25, %s32
      %s109 = sor.u32 %s107, %s108
      %p110 = scmp.eq.s32.totalorder %s109, 0
      %s112 = sadd.s32 %s111, 1
      %s113 = scalar_select %p110, %s111, %s112
      %p116 = pneg %p110
      %p117 = scmp.eq.s32.totalorder %s17, 1
      %p118 = por %p116, %p117
      %p119 = scmp.ne.s32.totalorder %s111, %s114
      %p120 = scmp.eq.s32.totalorder %s17, 0
      %p121 = por %p119, %p120
      %p122 = scmp.ne.s32.totalorder %s111, %s114
      %p123 = scmp.eq.s32.totalorder %s22, 1
      %p124 = por %p122, %p123
      %p125 = scmp.ne.s32.totalorder %s114, %s115
      %p126 = scmp.eq.s32.totalorder %s22, 0
      %p127 = por %p125, %p126
      %p128 = scmp.ne.s32.totalorder %s114, %s115
      %p129 = scmp.eq.s32.totalorder %s23, 1
      %p130 = por %p128, %p129
      %p132 = scmp.ne.s32.totalorder %s115, %s131
      %p133 = scmp.eq.s32.totalorder %s23, 0
      %p134 = por %p132, %p133
      %p135 = scmp.le.s32.totalorder 1, %s17
      %p136 = scmp.lt.s32.totalorder %s17, 3
      %p137 = pnand %p135, %p136
      %p138 = pneg %p137
      // Predicated region
      $region9: #{tpu_custom_call.1} parent=5 // pred_check
        _
      $region10: #{tpu_custom_call.1} parent=5 // pred_check_branch
        %140 = sbr.rel (%p137) target = $region12
      $region11: #{tpu_custom_call.1} parent=5 // pred_region
        %s141 = ssub.s32 %s17, 1
        // Predicated region
        $region13: #{tpu_custom_call.1} parent=11 // pred_check
          %p142 = pneg %p50
        $region14: #{tpu_custom_call.1} parent=11 // pred_check_branch
          %144 = sbr.rel (%p142) target = $region16
        $region15: #{tpu_custom_call.1} parent=11 // pred_region
          %s146 = ssub.s32 32, 32
          %147 = vsyncadd [#allocation5], %s146
          %150 = dma.hbm_to_smem %s0, 32, [#allocation2], [#allocation5]
        $region16: #{tpu_custom_call.1} parent=11 // pred_fallthru
          _
        // Predicated region
        $region17: #{tpu_custom_call.1} parent=11 // pred_check
          %p151 = pneg %p71
        $region18: #{tpu_custom_call.1} parent=11 // pred_check_branch
          %153 = sbr.rel (%p151) target = $region20
        $region19: #{tpu_custom_call.1} parent=11 // pred_region
          %s155 = ssub.s32 16, 16
          %156 = vsyncadd [#allocation6], %s155
          %s158 = sshll.u32 %s1, 4
          %s159 = int_to_ptr.vmem [resolvable:$true] %s158
          %161 = dma.vmem_to_smem %s159, 16, [#allocation7], [#allocation6]
        $region20: #{tpu_custom_call.1} parent=11 // pred_fallthru
          _
      $region12: #{tpu_custom_call.1} parent=5 // pred_fallthru
        _
      %p162 = scmp.lt.s32.totalorder %s17, 2
      // Predicated region
      $region21: #{tpu_custom_call.1} parent=5 // pred_check
        %p163 = pneg %p162
      $region22: #{tpu_custom_call.1} parent=5 // pred_check_branch
        %165 = sbr.rel (%p163) target = $region24
      $region23: #{tpu_custom_call.1} parent=5 // pred_region
        // Predicated region
        $region25: #{tpu_custom_call.1} parent=23 // pred_check
          %p166 = pneg %p93
        $region26: #{tpu_custom_call.1} parent=23 // pred_check_branch
          %168 = sbr.rel (%p166) target = $region28
        $region27: #{tpu_custom_call.1} parent=23 // pred_region
          %s169 = sand.u32 %s83, 1
          %s170 = scalar_lea.sflag [#allocation3], %s169
          %s171 = sand.u32 %s83, 1
          %s172 = smul.addr %s171, 16
          %s173 = scalar_lea.vmem [#allocation8], %s172
          %s175 = ssub.s32 256, 256
          %176 = vsyncadd %s170, %s175
          %s177 = smul.addr %s24, 4
          %s178 = sadd.s32 %s25, %s177
          %s179 = smul.addr %s178, 64
          %s180 = scalar_lea.hbm %s2, %s179
          %s181 = sshll.u32 %s173, 4
          %s182 = int_to_ptr.vmem [resolvable:$true] %s181
          %187 = dma.hbm_to_vmem [thread:$0]  %s180, 256, %s182, %s170, 64, 64, 4
        $region28: #{tpu_custom_call.1} parent=23 // pred_fallthru
          _
      $region24: #{tpu_custom_call.1} parent=5 // pred_fallthru
        _
      %p188 = scmp.le.s32.totalorder 1, %s17
      %p189 = scmp.lt.s32.totalorder %s17, 3
      %p190 = pnand %p188, %p189
      %p191 = pneg %p190
      // Predicated region
      $region29: #{tpu_custom_call.1} parent=5 // pred_check
        _
      $region30: #{tpu_custom_call.1} parent=5 // pred_check_branch
        %193 = sbr.rel (%p190) target = $region32
      $region31: #{tpu_custom_call.1} parent=5 // pred_region
        %s194 = ssub.s32 %s17, 1
        // Predicated region
        $region33: #{tpu_custom_call.1} parent=31 // pred_check
          %p195 = pneg %p50
        $region34: #{tpu_custom_call.1} parent=31 // pred_check_branch
          %197 = sbr.rel (%p195) target = $region36
        $region35: #{tpu_custom_call.1} parent=31 // pred_region
          %198 = dma.done [#allocation5], 32
        $region36: #{tpu_custom_call.1} parent=31 // pred_fallthru
          _
        // Predicated region
        $region37: #{tpu_custom_call.1} parent=31 // pred_check
          %p199 = pneg %p71
        $region38: #{tpu_custom_call.1} parent=31 // pred_check_branch
          %201 = sbr.rel (%p199) target = $region40
        $region39: #{tpu_custom_call.1} parent=31 // pred_region
          %202 = dma.done [#allocation6], 16
        $region40: #{tpu_custom_call.1} parent=31 // pred_fallthru
          _
        %s203 = sand.u32 %s86, 1
        %s204 = scalar_lea.sflag [#allocation3], %s203
        %s205 = sand.u32 %s86, 1
        %s206 = smul.addr %s205, 16
        %s207 = scalar_lea.vmem [#allocation8], %s206
        // Predicated region
        $region41: #{tpu_custom_call.1} parent=31 // pred_check
          %p208 = pneg %p99
        $region42: #{tpu_custom_call.1} parent=31 // pred_check_branch
          %210 = sbr.rel (%p208) target = $region44
        $region43: #{tpu_custom_call.1} parent=31 // pred_region
          %211 = dma.done %s204, 256
        $region44: #{tpu_custom_call.1} parent=31 // pred_fallthru
          _
        %212 = sfence
        %p213 = pneg %p50
        %p214 = pneg %p47
        %p215 = pneg %p71
        %p216 = pneg %p68
        %s217 = sand.u32 %s86, 1
        %s218 = scalar_lea.sflag [#allocation3], %s217
        %s219 = sand.u32 %s86, 1
        %s220 = smul.addr %s219, 16
        %s221 = scalar_lea.vmem [#allocation8], %s220
        %p222 = pneg %p99
        %p223 = pneg %p96
        %p224 = pneg %p127
        %p225 = pneg %p124
        %s226 = sand.u32 %s114, 1
        %s227 = scalar_lea.sflag [#allocation4], %s226
        %s228 = sand.u32 %s114, 1
        %s229 = smul.addr %s228, 8
        %s230 = scalar_lea.vmem [#allocation9], %s229
        %v231 = vld [vmem:[%s207] sm:$0xf]
        %s232 = sld [smem:[#allocation2]]
        %v233 = vstv %s232
        %v234 = vmul.f32 %v231, %v233
        %s235 = scalar_lea.vmem %s207, 4 [#allocation8]
        %v236 = vld [vmem:[%s235] sm:$0xf]
        %s237 = sld [smem:[#allocation2 + $0x1]]
        %v238 = vstv %s237
        %v239 = vmul.f32 %v236, %v238
        %v240 = vadd.f32 %v234, %v239
        %s241 = scalar_lea.vmem %s207, 8 [#allocation8]
        %v242 = vld [vmem:[%s241] sm:$0xf]
        %s243 = sld [smem:[#allocation2 + $0x2]]
        %v244 = vstv %s243
        %v245 = vmul.f32 %v242, %v244
        %v246 = vadd.f32 %v240, %v245
        %s247 = scalar_lea.vmem %s207, 12 [#allocation8]
        %v248 = vld [vmem:[%s247] sm:$0xf]
        %s249 = sld [smem:[#allocation2 + $0x3]]
        %v250 = vstv %s249
        %v251 = vmul.f32 %v248, %v250
        %v252 = vadd.f32 %v246, %v251
        %s253 = sld [smem:[#allocation7]]
        %v254 = vstv %s253
        %v255 = vadd.f32 %v252, %v254
        %v256 = vmul.f32 %v255, 0.5
        %v257 = vtanh.pop %v256
        %v258 = vmul.f32 %v257, 0.5
        %v259 = vadd.f32 %v258, 0.5
        %260 = vst [vmem:[%s230] sm:$0xf] %v259
        %v261 = vld [vmem:[%s207] sm:$0xf]
        %s262 = sld [smem:[#allocation2 + $0x80]]
        %v263 = vstv %s262
        %v264 = vmul.f32 %v261, %v263
        %v265 = vld [vmem:[%s235] sm:$0xf]
        %s266 = sld [smem:[#allocation2 + $0x81]]
        %v267 = vstv %s266
        %v268 = vmul.f32 %v265, %v267
        %v269 = vadd.f32 %v264, %v268
        %v270 = vld [vmem:[%s241] sm:$0xf]
        %s271 = sld [smem:[#allocation2 + $0x82]]
        %v272 = vstv %s271
        %v273 = vmul.f32 %v270, %v272
        %v274 = vadd.f32 %v269, %v273
        %v275 = vld [vmem:[%s247] sm:$0xf]
        %s276 = sld [smem:[#allocation2 + $0x83]]
        %v277 = vstv %s276
        %v278 = vmul.f32 %v275, %v277
        %v279 = vadd.f32 %v274, %v278
        %s280 = sld [smem:[#allocation7 + $0x1]]
        %v281 = vstv %s280
        %v282 = vadd.f32 %v279, %v281
        %v283 = vmul.f32 %v282, 0.5
        %v284 = vtanh.pop %v283
        %v285 = vmul.f32 %v284, 0.5
        %v286 = vadd.f32 %v285, 0.5
        %s287 = scalar_lea.vmem %s230, 4 [#allocation9]
        %288 = vst [vmem:[%s287] sm:$0xf] %v286
        %s289 = sand.u32 %s114, 1
        %s290 = scalar_lea.sflag [#allocation4], %s289
        %s291 = sand.u32 %s114, 1
        %s292 = smul.addr %s291, 8
        %s293 = scalar_lea.vmem [#allocation9], %s292
        // Predicated region
        $region45: #{tpu_custom_call.1} parent=31 // pred_check
          %p294 = pneg %p124
        $region46: #{tpu_custom_call.1} parent=31 // pred_check_branch
          %296 = sbr.rel (%p294) target = $region48
        $region47: #{tpu_custom_call.1} parent=31 // pred_region
          %s298 = ssub.s32 128, 128
          %299 = vsyncadd %s290, %s298
          %s300 = smul.addr %s26, 2
          %s301 = sadd.s32 %s27, %s300
          %s302 = smul.addr %s301, 64
          %s303 = scalar_lea.hbm %s3, %s302
          %s304 = sshll.u32 %s293, 4
          %s305 = int_to_ptr.vmem [resolvable:$true] %s304
          %310 = dma.vmem_to_hbm [thread:$0]  %s305, 128, %s303, %s290, 64, 64, 4
        $region48: #{tpu_custom_call.1} parent=31 // pred_fallthru
          _
      $region32: #{tpu_custom_call.1} parent=5 // pred_fallthru
        _
      %p311 = scmp.le.s32.totalorder 2, %s17
      // Predicated region
      $region49: #{tpu_custom_call.1} parent=5 // pred_check
        %p312 = pneg %p311
      $region50: #{tpu_custom_call.1} parent=5 // pred_check_branch
        %314 = sbr.rel (%p312) target = $region52
      $region51: #{tpu_custom_call.1} parent=5 // pred_region
        %s315 = ssub.s32 %s17, 2
        // Predicated region
        $region53: #{tpu_custom_call.1} parent=51 // pred_check
          %p316 = pneg %p130
        $region54: #{tpu_custom_call.1} parent=51 // pred_check_branch
          %318 = sbr.rel (%p316) target = $region56
        $region55: #{tpu_custom_call.1} parent=51 // pred_region
          %s319 = sand.u32 %s115, 1
          %s320 = scalar_lea.sflag [#allocation4], %s319
          %s321 = sand.u32 %s115, 1
          %s322 = smul.addr %s321, 8
          %s323 = scalar_lea.vmem [#allocation9], %s322
          %324 = dma.done %s320, 128
        $region56: #{tpu_custom_call.1} parent=51 // pred_fallthru
          _
      $region52: #{tpu_custom_call.1} parent=5 // pred_fallthru
        _
    $region6: #{tpu_custom_call.1} parent=1 // loop_footer
      %s21 = sadd.s32 1, %s17
    $region7: #{tpu_custom_call.1} parent=1 // loop_footer_branch
      %16 = sbr.rel target = $region3
    $region8: #{tpu_custom_call.1} parent=1 // loop_exit
      _
    %325 = vsyncpa [#allocation3], 1
    %s326 = scalar_lea.sflag [#allocation3], 1
    %327 = vsyncpa %s326, 1
    %328 = vsyncpa [#allocation4], 1
    %s329 = scalar_lea.sflag [#allocation4], 1
    %330 = vsyncpa %s329, 1
    %331 = vsyncpa [#allocation5], 1
    %s332 = scalar_lea.sflag [#allocation5], 1
    %333 = vsyncpa %s332, 1
    %334 = vsyncpa [#allocation6], 1
    %s335 = scalar_lea.sflag [#allocation6], 1
    %336 = vsyncpa %s335, 1

</llo_original>
